<compile_context>
chip_gen: v5e
topology: v5e:2x2
jax: 0.10.0
libtpu: 0.0.40
codegen_flags: <defaults>
</compile_context>

<pallas_src>
from functools import partial

import jax
import jax.numpy as jnp
from jax.experimental import pallas as pl
from jax.experimental.pallas import tpu as pltpu

# PyTorch uses EPSILON = 1e-40, which is a float32 *subnormal*.  TPUs flush
# f32 subnormals to zero, so that clamp floor would become 0 and inputs of
# exactly 0 (real) / 1 (gen) would give -log(0) = +inf instead of a large
# finite loss.  Use the nearest safe normal value; behaviour is otherwise
# identical for any input not within 1e-30 of the clamp boundaries.
EPSILON = 1e-30
LANES = 128
NCORES = 2  # leading "parallel" grid axis (v7x megacore); harmless on 1-TC chips


def _ceil_div(a, b):
    return -(-a // b)


def _dloss_kernel(real_ref, gen_ref, out_ref, acc_ref, *,
                  n_valid, tm, inner, total_blocks, label_smoothing):
    c = pl.program_id(0)           # core-split axis ("parallel")
    i = pl.program_id(1)           # streaming/reduction axis ("arbitrary")
    g = c * inner + i              # logical (un-clamped) row-block index

    @pl.when(i == 0)
    def _init():
        acc_ref[...] = jnp.zeros_like(acc_ref)

    r = real_ref[...].astype(jnp.float32)
    f = gen_ref[...].astype(jnp.float32)

    # -(y log p + (1-y) log(1-p)) with y=1 for real, y=0 for generated.
    d_loss_real = -jnp.log(jnp.clip(r, EPSILON, 1.0))
    if label_smoothing:  # static Python flag (matches nn.Module __init__ arg)
        d_loss_fake = -jnp.log(jnp.clip(1.0 - r, EPSILON, 1.0))
        d_loss_real = 0.9 * d_loss_real + 0.1 * d_loss_fake
    d_loss_gen = -jnp.log(jnp.clip(1.0 - f, EPSILON, 1.0))
    block_loss = d_loss_real + d_loss_gen            # (tm, 128) f32

    def _accumulate(val):
        # (tm,128) -> (tm//8, 8, 128) keeps (8,128) vreg tiles intact; the
        # axis-0 sum is pure VPU adds into the vreg-shaped accumulator.
        acc_ref[...] += val.reshape(tm // 8, 8, LANES).sum(axis=0)

    # Only the last real block (and any phantom block of the uneven core
    # split) can contain padding / out-of-bounds garbage.
    needs_mask = g >= (total_blocks - 1)

    @pl.when(jnp.logical_not(needs_mask))
    def _acc_full():
        _accumulate(block_loss)

    @pl.when(needs_mask)
    def _acc_masked():
        row = jax.lax.broadcasted_iota(jnp.int32, (tm, LANES), 0)
        lane = jax.lax.broadcasted_iota(jnp.int32, (tm, LANES), 1)
        flat_idx = (g * tm + row) * LANES + lane
        _accumulate(jnp.where(flat_idx < n_valid, block_loss, 0.0))

    @pl.when(i == pl.num_programs(1) - 1)
    def _finalize():
        out_ref[0] = acc_ref[...]   # per-core partial-sum slab (8, 128)


def dloss(logits_real, logits_gen, *, label_smoothing=False, tm=1024):
    assert logits_real.shape == logits_gen.shape
    n_valid = int(logits_real.size)
    assert n_valid > 0

    def _to_slab(x):
        flat = x.reshape(-1)                      # keep native dtype
        pad = (-n_valid) % (8 * LANES)            # pad only the small tail
        if pad:
            flat = jnp.pad(flat, (0, pad))
        return flat.reshape(-1, LANES)

    r2 = _to_slab(logits_real)
    g2 = _to_slab(logits_gen)
    rows = r2.shape[0]                            # multiple of 8, >= 8

    tm_eff = min(int(tm), rows)
    tm_eff -= tm_eff % 8
    tm_eff = max(tm_eff, 8)

    total_blocks = _ceil_div(rows, tm_eff)
    ncores = min(NCORES, total_blocks)
    inner = _ceil_div(total_blocks, ncores)
    last_block = total_blocks - 1

    def _in_map(c, i):
        # Clamp phantom blocks (uneven split) onto the last real block; the
        # kernel's n_valid mask zeroes their contribution.
        return (jnp.minimum(c * inner + i, last_block), 0)

    kernel = partial(_dloss_kernel, n_valid=n_valid, tm=tm_eff,
                     inner=inner, total_blocks=total_blocks,
                     label_smoothing=label_smoothing)

    partials = pl.pallas_call(
        kernel,
        out_shape=jax.ShapeDtypeStruct((ncores, 8, LANES), jnp.float32),
        grid_spec=pltpu.PrefetchScalarGridSpec(
            num_scalar_prefetch=0,
            grid=(ncores, inner),
            in_specs=[
                pl.BlockSpec((tm_eff, LANES), _in_map),
                pl.BlockSpec((tm_eff, LANES), _in_map),
            ],
            out_specs=pl.BlockSpec((1, 8, LANES), lambda c, i: (c, 0, 0)),
            scratch_shapes=[pltpu.VMEM((8, LANES), jnp.float32)],
        ),
        compiler_params=pltpu.CompilerParams(
            dimension_semantics=("parallel", "arbitrary")),
    )(r2, g2)

    # Tiny final cross-lane reduce + mean in XLA.
    return jnp.sum(partials) / jnp.float32(n_valid)


def _dloss_ref(logits_real, logits_gen, label_smoothing=False):
    r = logits_real.astype(jnp.float32)
    g = logits_gen.astype(jnp.float32)
    d_loss_real = -jnp.log(jnp.clip(r, EPSILON, 1.0))
    if label_smoothing:
        d_loss_real = (0.9 * d_loss_real
                       + 0.1 * (-jnp.log(jnp.clip(1.0 - r, EPSILON, 1.0))))
    d_loss_gen = -jnp.log(jnp.clip(1.0 - g, EPSILON, 1.0))
    return jnp.mean(d_loss_real + d_loss_gen)


if __name__ == "__main__":
    key = jax.random.PRNGKey(0)

    ok = True

    # Case 1: typical discriminator output shape (batch, seq, feat) — single
    # block, includes boundary values to exercise the clamp path.
    k1, k2, key = jax.random.split(key, 3)
    shape = (2, 8, 16)
    lr = jax.random.uniform(k1, shape, jnp.float32, minval=0.05, maxval=0.95)
    lg = jax.random.uniform(k2, shape, jnp.float32, minval=0.05, maxval=0.95)
    lr = lr.at[0, 0, 0].set(0.0)   # clamp floor on the real branch
    lg = lg.at[0, 0, 0].set(1.0)   # clamp floor on the generated branch

    for smooth in (False, True):
        out = jax.block_until_ready(dloss(lr, lg, label_smoothing=smooth))
        ref = _dloss_ref(lr, lg, label_smoothing=smooth)
        if not (jnp.isfinite(out) and jnp.allclose(out, ref, rtol=1e-5, atol=1e-5)):
            print("MISMATCH case1", smooth, out, ref)
            ok = False

    # Case 2: larger, non-multiple-of-128 size with a small tile to exercise
    # multi-block streaming, the masked last block, the 2-way core split and
    # the clamped phantom block (2500 elems -> 24 rows -> 3 blocks of 8 rows).
    k3, k4, key = jax.random.split(key, 3)
    shape2 = (5, 500)
    lr2 = jax.random.uniform(k3, shape2, jnp.float32, minval=0.05, maxval=0.95)
    lg2 = jax.random.uniform(k4, shape2, jnp.float32, minval=0.05, maxval=0.95)

    for smooth in (False, True):
        out = jax.block_until_ready(dloss(lr2, lg2, label_smoothing=smooth, tm=8))
        ref = _dloss_ref(lr2, lg2, label_smoothing=smooth)
        if not jnp.allclose(out, ref, rtol=1e-5, atol=1e-5):
            print("MISMATCH case2", smooth, out, ref)
            ok = False

    if ok:
        print("KERNEL_OK")
</pallas_src>

<mosaic_0001>
module attributes {stable_mosaic.version = 11 : i64} {
  func.func @_dloss_kernel(%arg0: i32, %arg1: i32, %arg2: memref<8x128xf32, #tpu.memory_space<vmem>>, %arg3: memref<8x128xf32, #tpu.memory_space<vmem>>, %arg4: memref<1x8x128xf32, #tpu.memory_space<vmem>>, %arg5: memref<8x128xf32, #tpu.memory_space<vmem>>) attributes {dimension_semantics = [#tpu.dimension_semantics<parallel>, #tpu.dimension_semantics<arbitrary>], iteration_bounds = array<i64: 1, 1>, scalar_prefetch = 0 : i64, scratch_operands = 1 : i64, tpu.core_type = #tpu.core_type<tc>, window_params = [{transform_indices = @transform_0, window_bounds = array<i64: 8, 128>}, {transform_indices = @transform_1, window_bounds = array<i64: 8, 128>}, {transform_indices = @transform_2, window_bounds = array<i64: 1, 8, 128>}]} {
    %c1_i32 = arith.constant 1 : i32
    %0 = arith.muli %arg0, %c1_i32 : i32
    %1 = arith.addi %0, %arg1 : i32
    %c0_i32 = arith.constant 0 : i32
    %2 = arith.cmpi eq, %arg1, %c0_i32 : i32
    %3 = arith.extui %2 : i1 to i32
    %c0_i32_0 = arith.constant 0 : i32
    %4 = arith.cmpi ne, %3, %c0_i32_0 : i32
    scf.if %4 {
      %cst_15 = arith.constant 0.000000e+00 : f32
      %33 = vector.broadcast %cst_15 : f32 to vector<8x128xf32>
      %c0_16 = arith.constant 0 : index
      %c0_17 = arith.constant 0 : index
      %34 = vector.load %arg5[%c0_16, %c0_17] : memref<8x128xf32, #tpu.memory_space<vmem>>, vector<8x128xf32>
      tpu.vector_store %arg5[%c0_16, %c0_17], %33 {strides = array<i32>} : memref<8x128xf32, #tpu.memory_space<vmem>>, vector<8x128xf32>,
    } else {
    }
    %c0 = arith.constant 0 : index
    %c0_1 = arith.constant 0 : index
    %5 = vector.load %arg2[%c0, %c0_1] : memref<8x128xf32, #tpu.memory_space<vmem>>, vector<8x128xf32>
    %c0_2 = arith.constant 0 : index
    %c0_3 = arith.constant 0 : index
    %6 = vector.load %arg3[%c0_2, %c0_3] : memref<8x128xf32, #tpu.memory_space<vmem>>, vector<8x128xf32>
    %cst = arith.constant 1.000000e-30 : f32
    %cst_4 = arith.constant 1.000000e+00 : f32
    %7 = vector.broadcast %cst : f32 to vector<8x128xf32>
    %8 = arith.maximumf %7, %5 : vector<8x128xf32>
    %9 = vector.broadcast %cst_4 : f32 to vector<8x128xf32>
    %10 = arith.minimumf %9, %8 : vector<8x128xf32>
    %11 = math.log %10 : vector<8x128xf32>
    %cst_5 = arith.constant 0.000000e+00 : f32
    %12 = vector.broadcast %cst_5 : f32 to vector<8x128xf32>
    %13 = arith.subf %12, %11 : vector<8x128xf32>
    %cst_6 = arith.constant 1.000000e+00 : f32
    %14 = vector.broadcast %cst_6 : f32 to vector<8x128xf32>
    %15 = arith.subf %14, %6 : vector<8x128xf32>
    %cst_7 = arith.constant 1.000000e-30 : f32
    %cst_8 = arith.constant 1.000000e+00 : f32
    %16 = vector.broadcast %cst_7 : f32 to vector<8x128xf32>
    %17 = arith.maximumf %16, %15 : vector<8x128xf32>
    %18 = vector.broadcast %cst_8 : f32 to vector<8x128xf32>
    %19 = arith.minimumf %18, %17 : vector<8x128xf32>
    %20 = math.log %19 : vector<8x128xf32>
    %cst_9 = arith.constant 0.000000e+00 : f32
    %21 = vector.broadcast %cst_9 : f32 to vector<8x128xf32>
    %22 = arith.subf %21, %20 : vector<8x128xf32>
    %23 = arith.addf %13, %22 : vector<8x128xf32>
    %c0_i32_10 = arith.constant 0 : i32
    %24 = arith.cmpi sge, %1, %c0_i32_10 : i32
    %true = arith.constant true
    %25 = arith.xori %24, %true : i1
    %26 = arith.extui %25 : i1 to i32
    %c0_i32_11 = arith.constant 0 : i32
    %27 = arith.cmpi ne, %26, %c0_i32_11 : i32
    scf.if %27 {
      %c0_15 = arith.constant 0 : index
      %c0_16 = arith.constant 0 : index
      %33 = vector.load %arg5[%c0_15, %c0_16] : memref<8x128xf32, #tpu.memory_space<vmem>>, vector<8x128xf32>
      %34 = vector.shape_cast %23 : vector<8x128xf32> to vector<1x8x128xf32>
      %cst_17 = arith.constant dense<0.000000e+00> : vector<8x128xf32>
      %35 = vector.multi_reduction <add>, %34, %cst_17 [0] : vector<1x8x128xf32> to vector<8x128xf32>
      %36 = arith.addf %33, %35 : vector<8x128xf32>
      %c0_18 = arith.constant 0 : index
      %c0_19 = arith.constant 0 : index
      %37 = vector.load %arg5[%c0_18, %c0_19] : memref<8x128xf32, #tpu.memory_space<vmem>>, vector<8x128xf32>
      tpu.vector_store %arg5[%c0_18, %c0_19], %36 {strides = array<i32>} : memref<8x128xf32, #tpu.memory_space<vmem>>, vector<8x128xf32>,
    } else {
    }
    %28 = arith.extui %24 : i1 to i32
    %c0_i32_12 = arith.constant 0 : i32
    %29 = arith.cmpi ne, %28, %c0_i32_12 : i32
    scf.if %29 {
      %33 = tpu.iota {dimensions = array<i32: 0>} : vector<8x128xi32>
      %34 = tpu.iota {dimensions = array<i32: 1>} : vector<8x128xi32>
      %c8_i32 = arith.constant 8 : i32
      %35 = arith.muli %1, %c8_i32 : i32
      %36 = vector.broadcast %35 : i32 to vector<8x128xi32>
      %37 = arith.addi %36, %33 : vector<8x128xi32>
      %c128_i32 = arith.constant 128 : i32
      %38 = vector.broadcast %c128_i32 : i32 to vector<8x128xi32>
      %39 = arith.muli %37, %38 : vector<8x128xi32>
      %40 = arith.addi %39, %34 : vector<8x128xi32>
      %c256_i32 = arith.constant 256 : i32
      %41 = vector.broadcast %c256_i32 : i32 to vector<8x128xi32>
      %42 = arith.cmpi slt, %40, %41 : vector<8x128xi32>
      %cst_15 = arith.constant 0.000000e+00 : f32
      %43 = vector.broadcast %cst_15 : f32 to vector<8x128xf32>
      %44 = arith.select %42, %23, %43 : vector<8x128xi1>, vector<8x128xf32>
      %c0_16 = arith.constant 0 : index
      %c0_17 = arith.constant 0 : index
      %45 = vector.load %arg5[%c0_16, %c0_17] : memref<8x128xf32, #tpu.memory_space<vmem>>, vector<8x128xf32>
      %46 = vector.shape_cast %44 : vector<8x128xf32> to vector<1x8x128xf32>
      %cst_18 = arith.constant dense<0.000000e+00> : vector<8x128xf32>
      %47 = vector.multi_reduction <add>, %46, %cst_18 [0] : vector<1x8x128xf32> to vector<8x128xf32>
      %48 = arith.addf %45, %47 : vector<8x128xf32>
      %c0_19 = arith.constant 0 : index
      %c0_20 = arith.constant 0 : index
      %49 = vector.load %arg5[%c0_19, %c0_20] : memref<8x128xf32, #tpu.memory_space<vmem>>, vector<8x128xf32>
      tpu.vector_store %arg5[%c0_19, %c0_20], %48 {strides = array<i32>} : memref<8x128xf32, #tpu.memory_space<vmem>>, vector<8x128xf32>,
    } else {
    }
    %c0_i32_13 = arith.constant 0 : i32
    %30 = arith.cmpi eq, %arg1, %c0_i32_13 : i32
    %31 = arith.extui %30 : i1 to i32
    %c0_i32_14 = arith.constant 0 : i32
    %32 = arith.cmpi ne, %31, %c0_i32_14 : i32
    scf.if %32 {
      %c0_15 = arith.constant 0 : index
      %c0_16 = arith.constant 0 : index
      %33 = vector.load %arg5[%c0_15, %c0_16] : memref<8x128xf32, #tpu.memory_space<vmem>>, vector<8x128xf32>
      %c0_17 = arith.constant 0 : index
      %c0_18 = arith.constant 0 : index
      %c0_19 = arith.constant 0 : index
      %34 = vector.load %arg4[%c0_17, %c0_18, %c0_19] : memref<1x8x128xf32, #tpu.memory_space<vmem>>, vector<1x8x128xf32>
      %35 = vector.shape_cast %34 : vector<1x8x128xf32> to vector<8x128xf32>
      %36 = vector.shape_cast %33 : vector<8x128xf32> to vector<1x8x128xf32>
      tpu.vector_store %arg4[%c0_17, %c0_18, %c0_19], %36 {strides = array<i32>} : memref<1x8x128xf32, #tpu.memory_space<vmem>>, vector<1x8x128xf32>,
    } else {
    }
    return
  }
  func.func @transform_0(%arg0: i32, %arg1: i32) -> (i32, i32) {
    %c1_i32 = arith.constant 1 : i32
    %0 = arith.muli %arg0, %c1_i32 : i32
    %1 = arith.addi %0, %arg1 : i32
    %c0_i32 = arith.constant 0 : i32
    %2 = arith.minsi %1, %c0_i32 : i32
    %c0_i32_0 = arith.constant 0 : i32
    %c0_i32_1 = arith.constant 0 : i32
    return %2, %c0_i32_0 : i32, i32
  }
  func.func @transform_1(%arg0: i32, %arg1: i32) -> (i32, i32) {
    %c1_i32 = arith.constant 1 : i32
    %0 = arith.muli %arg0, %c1_i32 : i32
    %1 = arith.addi %0, %arg1 : i32
    %c0_i32 = arith.constant 0 : i32
    %2 = arith.minsi %1, %c0_i32 : i32
    %c0_i32_0 = arith.constant 0 : i32
    %c0_i32_1 = arith.constant 0 : i32
    return %2, %c0_i32_0 : i32, i32
  }
  func.func @transform_2(%arg0: i32, %arg1: i32) -> (i32, i32, i32) {
    %c0_i32 = arith.constant 0 : i32
    %c0_i32_0 = arith.constant 0 : i32
    %c0_i32_1 = arith.constant 0 : i32
    return %arg0, %c0_i32, %c0_i32_0 : i32, i32, i32
  }
}

</mosaic_0001>

<llo_original>
// kernel: tpu_custom_call.1
$region0: #{tpu_custom_call.1}
  #allocation0 [shape = 'u32[]', space=smem, size = 0x4, offset = 0x4, fixed_abs, tag = 'smem constant byte address 0x4 - core index']
  #allocation1 [shape = 'u32[72,128]{1,0:T(1,128)}', space=vmem, size = 0x9000, scoped, tag = 'internal scratch']
  #allocation2 [shape = 'f32[8,128]{1,0:T(8,128)}', space=vmem, size = 0x1000, scoped, tag = 'scratch operand']
  %s0 = inlined_call_operand.hbm [shape: f32[8,128], index: 0, kind: input, shape index: {}]
  %s1 = inlined_call_operand.hbm [shape: f32[8,128], index: 1, kind: input, shape index: {}]
  %s2 = inlined_call_operand.hbm [shape: f32[1,8,128], index: 2, kind: output, shape index: {}]
  %s3 = sld [smem:[#allocation0]]
  $region42: #{tpu_custom_call.1} parent=0
    _
  %s5 = ssub.s32 1, %s3
  %s6 = scalar_select 0, %s5, %s3
  $region1: #{tpu_custom_call.1} parent=0
    #allocation3 [shape = 'u8[4096]{0}', space=vmem, size = 0x1000, scoped, tag = 'input window, operand 0, single buffered']
    #allocation4 [shape = 's32[1]{0}', space=sflag, size = 0x4, scoped, tag = 'scoped memory for tpu_custom_call.1']
    #allocation5 [shape = 's32[1]{0}', space=sflag, size = 0x4, scoped, tag = 'scoped memory for tpu_custom_call.1']
    #allocation6 [shape = 'u8[4096]{0}', space=vmem, size = 0x1000, scoped, tag = 'input window, operand 1, single buffered']
    #allocation7 [shape = 's32[1]{0}', space=sflag, size = 0x4, scoped, tag = 'scoped memory for tpu_custom_call.1']
    #allocation8 [shape = 'u8[4096]{0}', space=vmem, size = 0x1000, scoped, tag = 'output window, operand 0, single buffered']
    %7 = vsyncpa [#allocation4], 0
    %8 = vsyncpa [#allocation7], 0
    %9 = vsyncpa [#allocation5], 0
    // Predicated region
    $region2: #{tpu_custom_call.1} parent=1 // pred_check
      _
    $region3: #{tpu_custom_call.1} parent=1 // pred_check_branch
      %11 = sbr.rel (0) target = $region5
    $region4: #{tpu_custom_call.1} parent=1 // pred_region
      %s12 = sadd.s32 0, 0
      %p13 = scmp.lt.s32.totalorder %s12, 0
      %s14 = scalar_select %p13, %s12, 0
      %16 = vsyncadd [#allocation4], 0
      %s17 = smul.addr %s14, 8
      %s18 = scalar_lea.hbm %s0, %s17
      %s20 = sshll.u32 %s18, 4
      %s21 = int_to_ptr.hbm [resolvable:$true] %s20
      %s22 = sshll.u32 [#allocation3], 4
      %s23 = int_to_ptr.vmem [resolvable:$true] %s22
      %25 = dma.hbm_to_vmem [thread:$0]  %s21, 128, %s23, [#allocation4]
    $region5: #{tpu_custom_call.1} parent=1 // pred_fallthru
      _
    // Predicated region
    $region6: #{tpu_custom_call.1} parent=1 // pred_check
      _
    $region7: #{tpu_custom_call.1} parent=1 // pred_check_branch
      %27 = sbr.rel (0) target = $region9
    $region8: #{tpu_custom_call.1} parent=1 // pred_region
      %s28 = sadd.s32 0, 0
      %p29 = scmp.lt.s32.totalorder %s28, 0
      %s30 = scalar_select %p29, %s28, 0
      %32 = vsyncadd [#allocation7], 0
      %s33 = smul.addr %s30, 8
      %s34 = scalar_lea.hbm %s1, %s33
      %s36 = sshll.u32 %s34, 4
      %s37 = int_to_ptr.hbm [resolvable:$true] %s36
      %s38 = sshll.u32 [#allocation6], 4
      %s39 = int_to_ptr.vmem [resolvable:$true] %s38
      %41 = dma.hbm_to_vmem [thread:$0]  %s37, 128, %s39, [#allocation7]
    $region9: #{tpu_custom_call.1} parent=1 // pred_fallthru
      _
    // Predicated region
    $region10: #{tpu_custom_call.1} parent=1 // pred_check
      _
    $region11: #{tpu_custom_call.1} parent=1 // pred_check_branch
      %43 = sbr.rel (0) target = $region13
    $region12: #{tpu_custom_call.1} parent=1 // pred_region
      %45 = dma.done [#allocation4], 128
    $region13: #{tpu_custom_call.1} parent=1 // pred_fallthru
      _
    // Predicated region
    $region14: #{tpu_custom_call.1} parent=1 // pred_check
      _
    $region15: #{tpu_custom_call.1} parent=1 // pred_check_branch
      %47 = sbr.rel (0) target = $region17
    $region16: #{tpu_custom_call.1} parent=1 // pred_region
      %49 = dma.done [#allocation7], 128
    $region17: #{tpu_custom_call.1} parent=1 // pred_fallthru
      _
    %s50 = sadd.s32 0, 0
    %p51 = scmp.lt.s32.totalorder %s50, 0
    %s52 = scalar_select %p51, %s50, 0
    %s53 = sadd.s32 0, 0
    %p54 = scmp.lt.s32.totalorder %s53, 0
    %s55 = scalar_select %p54, %s53, 0
    %s56 = sadd.s32 0, 0
    %p57 = scmp.eq.s32.totalorder 0, 0
    // Predicated region
    $region18: #{tpu_custom_call.1} parent=1 // pred_check
      %p58 = pneg %p57
    $region19: #{tpu_custom_call.1} parent=1 // pred_check_branch
      %60 = sbr.rel (%p58) target = $region21
    $region20: #{tpu_custom_call.1} parent=1 // pred_region
      %61 = vst [vmem:[#allocation2] sm:$0xff] 0.0
    $region21: #{tpu_custom_call.1} parent=1 // pred_fallthru
      _
    %v62 = vld [vmem:[#allocation3] sm:$0xff]
    %v63 = vld [vmem:[#allocation6] sm:$0xff]
    %v64 = vmax.f32 %v62, 1e-30
    %v65 = vmin.f32 %v64, 1.0
    %v66 = vlog2.pop %v65
    %v67 = vmul.f32 %v66, 0.6931472
    %v68 = vsub.f32 0.0, %v67
    %v69 = vsub.f32 1.0, %v63
    %v70 = vmax.f32 %v69, 1e-30
    %v71 = vmin.f32 %v70, 1.0
    %v72 = vlog2.pop %v71
    %v73 = vmul.f32 %v72, 0.6931472
    %v74 = vsub.f32 0.0, %v73
    %v75 = vadd.f32 %v68, %v74
    %p76 = scmp.ge.s32.totalorder %s56, 0
    %p77 = scmp.lt.s32.totalorder %s56, 0
    // Predicated region
    $region22: #{tpu_custom_call.1} parent=1 // pred_check
      %p78 = pneg %p77
    $region23: #{tpu_custom_call.1} parent=1 // pred_check_branch
      %80 = sbr.rel (%p78) target = $region25
    $region24: #{tpu_custom_call.1} parent=1 // pred_region
      %v81 = vld [vmem:[#allocation2] sm:$0xff]
      %v82 = vadd.f32 %v75, 0.0
      %v83 = vadd.f32 %v81, %v82
      %84 = vst [vmem:[#allocation2] sm:$0xff] %v83
    $region25: #{tpu_custom_call.1} parent=1 // pred_fallthru
      _
    // Predicated region
    $region26: #{tpu_custom_call.1} parent=1 // pred_check
      %p85 = pneg %p76
    $region27: #{tpu_custom_call.1} parent=1 // pred_check_branch
      %87 = sbr.rel (%p85) target = $region29
    $region28: #{tpu_custom_call.1} parent=1 // pred_region
      %v88 = vlaneseq
      %v89 = vshrl.u32 %v88, 7
      %v90 = vlaneseq
      %v91 = vand.u32 %v90, 127
      %s92 = smul.u32 %s56, 8
      %v93 = vstv %s92
      %v94 = vadd.s32 %v93, %v89
      %v95 = vmul.u32 %v94, 128
      %v96 = vadd.s32 %v95, %v91
      %vm97 = vcmp.lt.s32.totalorder %v96, 256
      %v98 = vsel %vm97, %v75, 0.0
      %v99 = vld [vmem:[#allocation2] sm:$0xff]
      %v100 = vadd.f32 %v98, 0.0
      %v101 = vadd.f32 %v99, %v100
      %102 = vst [vmem:[#allocation2] sm:$0xff] %v101
    $region29: #{tpu_custom_call.1} parent=1 // pred_fallthru
      _
    // Predicated region
    $region30: #{tpu_custom_call.1} parent=1 // pred_check
      %p103 = pneg %p57
    $region31: #{tpu_custom_call.1} parent=1 // pred_check_branch
      %105 = sbr.rel (%p103) target = $region33
    $region32: #{tpu_custom_call.1} parent=1 // pred_region
      %v106 = vld [vmem:[#allocation2] sm:$0xff]
      %107 = vst [vmem:[#allocation8] sm:$0xff] %v106
    $region33: #{tpu_custom_call.1} parent=1 // pred_fallthru
      _
    // Predicated region
    $region34: #{tpu_custom_call.1} parent=1 // pred_check
      _
    $region35: #{tpu_custom_call.1} parent=1 // pred_check_branch
      %109 = sbr.rel (0) target = $region37
    $region36: #{tpu_custom_call.1} parent=1 // pred_region
      %111 = vsyncadd [#allocation5], 0
      %s113 = sshll.u32 [#allocation8], 4
      %s114 = int_to_ptr.vmem [resolvable:$true] %s113
      %s115 = sshll.u32 %s2, 4
      %s116 = int_to_ptr.hbm [resolvable:$true] %s115
      %118 = dma.vmem_to_hbm [thread:$0]  %s114, 128, %s116, [#allocation5]
    $region37: #{tpu_custom_call.1} parent=1 // pred_fallthru
      _
    // Predicated region
    $region38: #{tpu_custom_call.1} parent=1 // pred_check
      _
    $region39: #{tpu_custom_call.1} parent=1 // pred_check_branch
      %120 = sbr.rel (0) target = $region41
    $region40: #{tpu_custom_call.1} parent=1 // pred_region
      %122 = dma.done [#allocation5], 128
    $region41: #{tpu_custom_call.1} parent=1 // pred_fallthru
      _
    %123 = vsyncpa [#allocation4], 1
    %124 = vsyncpa [#allocation7], 1
    %125 = vsyncpa [#allocation5], 1

</llo_original>
